<compile_context>
chip_gen: v7x
topology: tpu7x:2x2x1
jax: 0.10.0
libtpu: 0.0.40
codegen_flags: <defaults>
</compile_context>

<pallas_src>
import functools

import jax
import jax.numpy as jnp
from jax.experimental import pallas as pl
from jax.experimental.pallas import tpu as pltpu

_LANES = 128
_MAX_TILE_ROWS = 8192      # 8192 * 128 * 4B = 4 MiB per f32 input per buffer


def _round_up(x: int, m: int) -> int:
    return ((x + m - 1) // m) * m


def _cdiv(a: int, b: int) -> int:
    return (a + b - 1) // b


def _sublane_align(dtype) -> int:
    # Second-minor block dim must be a multiple of 8 (f32/i32), 16 (bf16/f16),
    # 32 (i8/fp8).
    return max(8, 32 // jnp.dtype(dtype).itemsize)


def _margin_ranking_loss_kernel(x1_ref, x2_ref, y_ref, out_ref, *,
                                margin: float, n_valid: int):
    tile_rows = x1_ref.shape[0]
    i = pl.program_id(0)

    x1 = x1_ref[...].astype(jnp.float32)                 # (tile_rows, 128)
    x2 = x2_ref[...].astype(jnp.float32)                 # (tile_rows, 128)
    y = y_ref[...].astype(jnp.float32)                   # (tile_rows, 128)

    per = jnp.maximum(-y * (x1 - x2) + jnp.float32(margin), 0.0)

    # Mask out pad elements and partial-block garbage (VMEM OOB reads are not
    # checked) using the global flat element index.
    row = jax.lax.broadcasted_iota(jnp.int32, (tile_rows, _LANES), 0)
    lane = jax.lax.broadcasted_iota(jnp.int32, (tile_rows, _LANES), 1)
    gidx = (i * tile_rows + row) * _LANES + lane
    per = jnp.where(gidx < n_valid, per, 0.0)

    # Sublane-only reduction -> lane-dense (1, 128) partial sums for this tile.
    out_ref[...] = jnp.sum(per, axis=0, keepdims=True).reshape(1, 1, _LANES)


def margin_ranking_loss(input1, input2, target, *, margin: float = 0.0,
                        size_average: bool = True):
    """Pallas TPU implementation of F.margin_ranking_loss (forward only)."""
    x1 = jnp.ravel(input1)
    x2 = jnp.ravel(input2)
    y = jnp.ravel(target)
    n = x1.shape[0]
    assert x2.shape[0] == n and y.shape[0] == n, "input1/input2/target size mismatch"

    align = max(_sublane_align(x1.dtype), _sublane_align(x2.dtype),
                _sublane_align(y.dtype))
    chunk = align * _LANES
    n_padded = _round_up(n, chunk)
    pad = n_padded - n
    if pad:
        # Minimal pad (< align*128 elems) just to make the reshape legal; the
        # pad values are irrelevant because the kernel masks by element index.
        x1 = jnp.pad(x1, (0, pad))
        x2 = jnp.pad(x2, (0, pad))
        y = jnp.pad(y, (0, pad))

    rows = n_padded // _LANES
    x1 = x1.reshape(rows, _LANES)
    x2 = x2.reshape(rows, _LANES)
    y = y.reshape(rows, _LANES)

    # Biggest tile that (a) fits a 32 MiB VMEM budget double-buffered and
    # (b) leaves >= 2 grid tiles when possible (v7x megacore sharding).
    tile_rows = min(_MAX_TILE_ROWS, _round_up(_cdiv(rows, 2), align))
    num_tiles = _cdiv(rows, tile_rows)

    kernel = functools.partial(_margin_ranking_loss_kernel,
                               margin=float(margin), n_valid=n)

    partials = pl.pallas_call(
        kernel,
        out_shape=jax.ShapeDtypeStruct((num_tiles, 1, _LANES), jnp.float32),
        grid=(num_tiles,),
        in_specs=[
            pl.BlockSpec((tile_rows, _LANES), lambda i: (i, 0)),   # x1
            pl.BlockSpec((tile_rows, _LANES), lambda i: (i, 0)),   # x2
            pl.BlockSpec((tile_rows, _LANES), lambda i: (i, 0)),   # y
        ],
        out_specs=pl.BlockSpec((1, 1, _LANES), lambda i: (i, 0, 0)),
        compiler_params=pltpu.CompilerParams(
            dimension_semantics=("parallel",),
            vmem_limit_bytes=32 * 1024 * 1024,
        ),
    )(x1, x2, y)

    total = jnp.sum(partials)          # tiny cross-lane / cross-tile reduce
    if size_average:
        return total / jnp.float32(n)
    return total


class MarginRankingLoss:
    """Mirror of torch.nn.MarginRankingLoss (forward only).

    loss(x1, x2, y) = max(0, -y * (x1 - x2) + margin), reduced by mean (default)
    or sum over the mini-batch.
    """
    # TODO(synk): backward / autograd not implemented (forward-only kernel).

    def __init__(self, margin: float = 0.0, size_average: bool = True):
        self.margin = margin
        self.size_average = size_average

    def __call__(self, input1, input2, target):
        return margin_ranking_loss(
            input1, input2, target,
            margin=self.margin, size_average=self.size_average)


def _reference(input1, input2, target, margin, size_average):
    x1 = jnp.ravel(input1).astype(jnp.float32)
    x2 = jnp.ravel(input2).astype(jnp.float32)
    y = jnp.ravel(target).astype(jnp.float32)
    per = jnp.maximum(-y * (x1 - x2) + jnp.float32(margin), 0.0)
    return jnp.mean(per) if size_average else jnp.sum(per)


if __name__ == "__main__":
    key = jax.random.PRNGKey(0)
    k1, k2, k3 = jax.random.split(key, 3)

    # Small 1-D mini-batch, consistent with the module's 1-D-tensor contract.
    N = 32
    MARGIN = 0.1
    x1 = jax.random.normal(k1, (N,), dtype=jnp.float32)
    x2 = jax.random.normal(k2, (N,), dtype=jnp.float32)
    y = jnp.where(jax.random.bernoulli(k3, 0.5, (N,)), 1, -1).astype(jnp.int32)

    loss_mod = MarginRankingLoss(margin=MARGIN, size_average=True)
    loss = loss_mod(x1, x2, y)
    jax.block_until_ready(loss)
    ref_mean = _reference(x1, x2, y, MARGIN, True)
    assert jnp.allclose(loss, ref_mean, atol=1e-5, rtol=1e-5), (loss, ref_mean)

    loss_sum = margin_ranking_loss(x1, x2, y, margin=MARGIN, size_average=False)
    jax.block_until_ready(loss_sum)
    ref_sum = _reference(x1, x2, y, MARGIN, False)
    assert jnp.allclose(loss_sum, ref_sum, atol=1e-5, rtol=1e-5), (loss_sum, ref_sum)

    # Ragged, non-f32 case: exercises the no-upcast stream + in-kernel tail mask.
    N2 = 300
    x1b = jax.random.normal(k1, (N2,), dtype=jnp.bfloat16)
    x2b = jax.random.normal(k2, (N2,), dtype=jnp.bfloat16)
    yb = jnp.where(jax.random.bernoulli(k3, 0.5, (N2,)), 1, -1).astype(jnp.int8)
    loss_b = margin_ranking_loss(x1b, x2b, yb, margin=MARGIN, size_average=True)
    jax.block_until_ready(loss_b)
    ref_b = _reference(x1b, x2b, yb, MARGIN, True)
    assert jnp.allclose(loss_b, ref_b, atol=1e-4, rtol=1e-4), (loss_b, ref_b)

    print("KERNEL_OK")
</pallas_src>

<mosaic_0001>
module attributes {stable_mosaic.version = 11 : i64} {
  func.func @_margin_ranking_loss_kernel(%arg0: i32, %arg1: memref<8x128xf32, #tpu.memory_space<vmem>>, %arg2: memref<8x128xf32, #tpu.memory_space<vmem>>, %arg3: memref<8x128xi32, #tpu.memory_space<vmem>>, %arg4: memref<1x1x128xf32, #tpu.memory_space<vmem>>) attributes {dimension_semantics = [#tpu.dimension_semantics<parallel>], iteration_bounds = array<i64: 1>, scalar_prefetch = 0 : i64, scratch_operands = 0 : i64, tpu.core_type = #tpu.core_type<tc>, window_params = [{transform_indices = @transform_0, window_bounds = array<i64: 8, 128>}, {transform_indices = @transform_1, window_bounds = array<i64: 8, 128>}, {transform_indices = @transform_2, window_bounds = array<i64: 8, 128>}, {transform_indices = @transform_3, window_bounds = array<i64: 1, 1, 128>}]} {
    %c0 = arith.constant 0 : index
    %c0_0 = arith.constant 0 : index
    %0 = vector.load %arg1[%c0, %c0_0] : memref<8x128xf32, #tpu.memory_space<vmem>>, vector<8x128xf32>
    %c0_1 = arith.constant 0 : index
    %c0_2 = arith.constant 0 : index
    %1 = vector.load %arg2[%c0_1, %c0_2] : memref<8x128xf32, #tpu.memory_space<vmem>>, vector<8x128xf32>
    %c0_3 = arith.constant 0 : index
    %c0_4 = arith.constant 0 : index
    %2 = vector.load %arg3[%c0_3, %c0_4] : memref<8x128xi32, #tpu.memory_space<vmem>>, vector<8x128xi32>
    %3 = arith.sitofp %2 : vector<8x128xi32> to vector<8x128xf32>
    %cst = arith.constant 0.000000e+00 : f32
    %4 = vector.broadcast %cst : f32 to vector<8x128xf32>
    %5 = arith.subf %4, %3 : vector<8x128xf32>
    %6 = arith.subf %0, %1 : vector<8x128xf32>
    %7 = arith.mulf %5, %6 : vector<8x128xf32>
    %cst_5 = arith.constant 1.000000e-01 : f32
    %8 = vector.broadcast %cst_5 : f32 to vector<8x128xf32>
    %9 = arith.addf %7, %8 : vector<8x128xf32>
    %cst_6 = arith.constant 0.000000e+00 : f32
    %10 = vector.broadcast %cst_6 : f32 to vector<8x128xf32>
    %11 = arith.maximumf %9, %10 : vector<8x128xf32>
    %12 = tpu.iota {dimensions = array<i32: 0>} : vector<8x128xi32>
    %13 = tpu.iota {dimensions = array<i32: 1>} : vector<8x128xi32>
    %c8_i32 = arith.constant 8 : i32
    %14 = arith.muli %arg0, %c8_i32 : i32
    %15 = vector.broadcast %14 : i32 to vector<8x128xi32>
    %16 = arith.addi %15, %12 : vector<8x128xi32>
    %c128_i32 = arith.constant 128 : i32
    %17 = vector.broadcast %c128_i32 : i32 to vector<8x128xi32>
    %18 = arith.muli %16, %17 : vector<8x128xi32>
    %19 = arith.addi %18, %13 : vector<8x128xi32>
    %c32_i32 = arith.constant 32 : i32
    %20 = vector.broadcast %c32_i32 : i32 to vector<8x128xi32>
    %21 = arith.cmpi slt, %19, %20 : vector<8x128xi32>
    %cst_7 = arith.constant 0.000000e+00 : f32
    %22 = vector.broadcast %cst_7 : f32 to vector<8x128xf32>
    %23 = arith.select %21, %11, %22 : vector<8x128xi1>, vector<8x128xf32>
    %cst_8 = arith.constant dense<0.000000e+00> : vector<128xf32>
    %24 = vector.multi_reduction <add>, %23, %cst_8 [0] : vector<8x128xf32> to vector<128xf32>
    %25 = vector.shape_cast %24 : vector<128xf32> to vector<1x128xf32>
    %26 = vector.shape_cast %25 : vector<1x128xf32> to vector<1x1x128xf32>
    %c0_9 = arith.constant 0 : index
    %c0_10 = arith.constant 0 : index
    %c0_11 = arith.constant 0 : index
    %27 = vector.load %arg4[%c0_9, %c0_10, %c0_11] : memref<1x1x128xf32, #tpu.memory_space<vmem>>, vector<1x1x128xf32>
    tpu.vector_store %arg4[%c0_9, %c0_10, %c0_11], %26 {strides = array<i32>} : memref<1x1x128xf32, #tpu.memory_space<vmem>>, vector<1x1x128xf32>,
    return
  }
  func.func @transform_0(%arg0: i32) -> (i32, i32) {
    %c0_i32 = arith.constant 0 : i32
    %c0_i32_0 = arith.constant 0 : i32
    return %arg0, %c0_i32 : i32, i32
  }
  func.func @transform_1(%arg0: i32) -> (i32, i32) {
    %c0_i32 = arith.constant 0 : i32
    %c0_i32_0 = arith.constant 0 : i32
    return %arg0, %c0_i32 : i32, i32
  }
  func.func @transform_2(%arg0: i32) -> (i32, i32) {
    %c0_i32 = arith.constant 0 : i32
    %c0_i32_0 = arith.constant 0 : i32
    return %arg0, %c0_i32 : i32, i32
  }
  func.func @transform_3(%arg0: i32) -> (i32, i32, i32) {
    %c0_i32 = arith.constant 0 : i32
    %c0_i32_0 = arith.constant 0 : i32
    %c0_i32_1 = arith.constant 0 : i32
    return %arg0, %c0_i32, %c0_i32_0 : i32, i32, i32
  }
}

</mosaic_0001>

<llo_original>
// kernel: tpu_custom_call.1
$region0: #{tpu_custom_call.1}
  #allocation0 [shape = 'u32[]', space=smem, size = 0x4, offset = 0x4, fixed_abs, tag = 'smem constant byte address 0x4 - core index']
  #allocation1 [shape = 'u32[144,128]{1,0:T(1,128)}', space=vmem, size = 0x12000, scoped, tag = 'internal scratch']
  %s0 = inlined_call_operand.hbm [shape: f32[8,128], index: 0, kind: input, shape index: {}]
  %s1 = inlined_call_operand.hbm [shape: f32[8,128], index: 1, kind: input, shape index: {}]
  %s2 = inlined_call_operand.hbm [shape: s32[8,128], index: 2, kind: input, shape index: {}]
  %s3 = inlined_call_operand.hbm [shape: f32[1,1,128], index: 3, kind: output, shape index: {}]
  %s4 = sld [smem:[#allocation0]]
  $region34: #{tpu_custom_call.1} parent=0
    _
  %s6 = ssub.s32 1, %s4
  %s7 = scalar_select 0, %s6, %s4
  $region1: #{tpu_custom_call.1} parent=0
    #allocation2 [shape = 'u8[4096]{0}', space=vmem, size = 0x1000, scoped, tag = 'input window, operand 0, single buffered']
    #allocation3 [shape = 's32[1]{0}', space=sflag, size = 0x4, scoped, tag = 'scoped memory for tpu_custom_call.1']
    #allocation4 [shape = 's32[1]{0}', space=sflag, size = 0x4, scoped, tag = 'scoped memory for tpu_custom_call.1']
    #allocation5 [shape = 'u8[4096]{0}', space=vmem, size = 0x1000, scoped, tag = 'input window, operand 1, single buffered']
    #allocation6 [shape = 's32[1]{0}', space=sflag, size = 0x4, scoped, tag = 'scoped memory for tpu_custom_call.1']
    #allocation7 [shape = 'u8[4096]{0}', space=vmem, size = 0x1000, scoped, tag = 'input window, operand 2, single buffered']
    #allocation8 [shape = 'u8[512]{0}', space=vmem, size = 0x400, scoped, tag = 'output window, operand 0, single buffered']
    %8 = vsyncpa [#allocation3], 0
    %9 = vsyncpa [#allocation6], 0
    %10 = vsyncpa [#allocation4], 0
    // Predicated region
    $region2: #{tpu_custom_call.1} parent=1 // pred_check
      _
    $region3: #{tpu_custom_call.1} parent=1 // pred_check_branch
      %12 = sbr.rel (0) target = $region5
    $region4: #{tpu_custom_call.1} parent=1 // pred_region
      %s14 = ssub.s32 128, 128
      %15 = vsyncadd [#allocation3], %s14
      %s17 = sshll.u32 [#allocation2], 4
      %s18 = int_to_ptr.vmem [resolvable:$true] %s17
      %20 = dma.hbm_to_vmem [thread:$0]  %s0, 128, %s18, [#allocation3]
    $region5: #{tpu_custom_call.1} parent=1 // pred_fallthru
      _
    // Predicated region
    $region6: #{tpu_custom_call.1} parent=1 // pred_check
      _
    $region7: #{tpu_custom_call.1} parent=1 // pred_check_branch
      %22 = sbr.rel (0) target = $region9
    $region8: #{tpu_custom_call.1} parent=1 // pred_region
      %s24 = ssub.s32 128, 128
      %25 = vsyncadd [#allocation6], %s24
      %s27 = sshll.u32 [#allocation5], 4
      %s28 = int_to_ptr.vmem [resolvable:$true] %s27
      %30 = dma.hbm_to_vmem [thread:$0]  %s1, 128, %s28, [#allocation6]
    $region9: #{tpu_custom_call.1} parent=1 // pred_fallthru
      _
    // Predicated region
    $region10: #{tpu_custom_call.1} parent=1 // pred_check
      _
    $region11: #{tpu_custom_call.1} parent=1 // pred_check_branch
      %32 = sbr.rel (0) target = $region13
    $region12: #{tpu_custom_call.1} parent=1 // pred_region
      %s34 = ssub.s32 128, 128
      %35 = vsyncadd [#allocation6], %s34
      %s37 = sshll.u32 [#allocation7], 4
      %s38 = int_to_ptr.vmem [resolvable:$true] %s37
      %40 = dma.hbm_to_vmem [thread:$0]  %s2, 128, %s38, [#allocation6]
    $region13: #{tpu_custom_call.1} parent=1 // pred_fallthru
      _
    // Predicated region
    $region14: #{tpu_custom_call.1} parent=1 // pred_check
      _
    $region15: #{tpu_custom_call.1} parent=1 // pred_check_branch
      %42 = sbr.rel (0) target = $region17
    $region16: #{tpu_custom_call.1} parent=1 // pred_region
      %43 = dma.done [#allocation3], 128
    $region17: #{tpu_custom_call.1} parent=1 // pred_fallthru
      _
    // Predicated region
    $region18: #{tpu_custom_call.1} parent=1 // pred_check
      _
    $region19: #{tpu_custom_call.1} parent=1 // pred_check_branch
      %45 = sbr.rel (0) target = $region21
    $region20: #{tpu_custom_call.1} parent=1 // pred_region
      %46 = dma.done [#allocation6], 128
    $region21: #{tpu_custom_call.1} parent=1 // pred_fallthru
      _
    // Predicated region
    $region22: #{tpu_custom_call.1} parent=1 // pred_check
      _
    $region23: #{tpu_custom_call.1} parent=1 // pred_check_branch
      %48 = sbr.rel (0) target = $region25
    $region24: #{tpu_custom_call.1} parent=1 // pred_region
      %49 = dma.done [#allocation6], 128
    $region25: #{tpu_custom_call.1} parent=1 // pred_fallthru
      _
    %v50 = vld [vmem:[#allocation2] sm:$0xff]
    %v51 = vld [vmem:[#allocation5] sm:$0xff]
    %v52 = vld [vmem:[#allocation7] sm:$0xff]
    %v53 = vcvt.s32.f32 %v52
    %v54 = vsub.f32 0.0, %v53
    %v55 = vsub.f32 %v50, %v51
    %v56 = vmul.f32 %v54, %v55
    %v57 = vadd.f32 %v56, 0.1
    %v58 = vmax.f32 %v57, 0.0
    %v59 = vlaneseq
    %v60 = vshrl.u32 %v59, 7
    %v61 = vlaneseq
    %v62 = vand.u32 %v61, 127
    %s63 = smul.u32 0, 8
    %v64 = vstv %s63
    %v65 = vadd.s32 %v64, %v60
    %v66 = vmul.u32 %v65, 128
    %v67 = vadd.s32 %v66, %v62
    %vm68 = vcmp.lt.s32.totalorder %v67, 32
    %v69 = vsel %vm68, %v58, 0.0
    %v70 = vrot.slane %v69, 4
    %v71 = vadd.f32 %v69, %v70
    %v72 = vrot.slane %v71, 2
    %v73 = vadd.f32 %v71, %v72
    %v74 = vrot.slane %v73, 1
    %v75 = vadd.f32 %v73, %v74
    %76 = vst [vmem:[#allocation8] sm:$0x1] %v75
    // Predicated region
    $region26: #{tpu_custom_call.1} parent=1 // pred_check
      _
    $region27: #{tpu_custom_call.1} parent=1 // pred_check_branch
      %78 = sbr.rel (0) target = $region29
    $region28: #{tpu_custom_call.1} parent=1 // pred_region
      %s80 = ssub.s32 16, 16
      %81 = vsyncadd [#allocation4], %s80
      %s83 = sshll.u32 [#allocation8], 4
      %s84 = int_to_ptr.vmem [resolvable:$true] %s83
      %86 = dma.vmem_to_hbm [thread:$0]  %s84, 16, %s3, [#allocation4]
    $region29: #{tpu_custom_call.1} parent=1 // pred_fallthru
      _
    // Predicated region
    $region30: #{tpu_custom_call.1} parent=1 // pred_check
      _
    $region31: #{tpu_custom_call.1} parent=1 // pred_check_branch
      %88 = sbr.rel (0) target = $region33
    $region32: #{tpu_custom_call.1} parent=1 // pred_region
      %89 = dma.done [#allocation4], 16
    $region33: #{tpu_custom_call.1} parent=1 // pred_fallthru
      _
    %90 = vsyncpa [#allocation3], 1
    %91 = vsyncpa [#allocation6], 1
    %92 = vsyncpa [#allocation4], 1

</llo_original>
